<compile_context>
chip_gen: v5e
topology: v5e:2x2
jax: 0.10.0
libtpu: 0.0.40
codegen_flags: <defaults>
</compile_context>

<pallas_src>
import functools

import jax
import jax.numpy as jnp
from jax import lax
from jax.experimental import pallas as pl
from jax.experimental.pallas import tpu as pltpu

_NEG_BIG = -1e30  # finite "minus infinity" for masked (padded) negative rows


def _patchnce_kernel(q_ref, k_ref, *rest, inv_T, has_weight, k_resident,
                     tile, p_real, mask_tail):
    # q_ref: (1, T, D); k_ref: (1, T, D) or resident (1, P_pad, D)
    # optional w_ref: (1, T, T) pre-transposed, pre-blocked weight tile
    # outputs lossvec_ref / ce_ref: (1, 1, T); scratch m/l/pos: (1, T) f32
    if has_weight:
        w_ref, lossvec_ref, ce_ref, m_ref, l_ref, pos_ref = rest
    else:
        w_ref = None
        lossvec_ref, ce_ref, m_ref, l_ref, pos_ref = rest

    qi = pl.program_id(1)
    ki = pl.program_id(2)
    nk = pl.num_programs(2)

    q = q_ref[0]                                         # (T, D), input dtype
    if k_resident:
        kstart = pl.multiple_of(ki * tile, tile)
        k = k_ref[0, pl.ds(kstart, tile), :]             # slice of resident k
    else:
        k = k_ref[0]                                     # (T, D)

    # Fold 1/T into q (one O(T*D) multiply instead of O(T^2)).
    q_s = q * inv_T

    # MXU: transposed, already-scaled similarity tile sT[r, c] = <k_r, q_c>/T.
    # Contraction on the last dims -> no explicit transpose; the softmax
    # reductions become sublane reductions -> lane-dense (1, T) rows.
    sT = lax.dot_general(k, q_s,
                         dimension_numbers=(((1,), (1,)), ((), ())),
                         preferred_element_type=jnp.float32)   # (T, T) f32

    w_f = w_ref[0].astype(jnp.float32) if has_weight else None

    if mask_tail:
        # Kill padded negative rows (global k index >= p_real). Only emitted
        # for awkward P; otherwise zero cost.
        row_g = ki * tile + lax.broadcasted_iota(jnp.int32, sT.shape, 0)
        valid = row_g < p_real
    else:
        valid = None

    @pl.when(ki == 0)
    def _init():
        m_ref[...] = jnp.full(m_ref.shape, -jnp.inf, jnp.float32)
        l_ref[...] = jnp.zeros(l_ref.shape, jnp.float32)

    def _lse_update(s):
        # Online logsumexp over the negatives (sublane) axis of s.
        m_prev = m_ref[...]                                     # (1, T)
        m_new = jnp.maximum(m_prev, jnp.max(s, axis=0, keepdims=True))
        l_ref[...] = (l_ref[...] * jnp.exp(m_prev - m_new)
                      + jnp.sum(jnp.exp(s - m_new), axis=0, keepdims=True))
        m_ref[...] = m_new

    def _finish(s):
        if valid is not None:
            s = jnp.where(valid, s, _NEG_BIG)
        _lse_update(s)

    # Diagonal machinery runs only on the 1-of-nt diagonal tiles.
    @pl.when(ki == qi)
    def _diag_tile():
        d_eq = (lax.broadcasted_iota(jnp.int32, sT.shape, 0)
                == lax.broadcasted_iota(jnp.int32, sT.shape, 1))
        # Positive logits l_pos/T read off the raw (un-weighted) diagonal.
        pos_ref[...] = jnp.sum(jnp.where(d_eq, sT, 0.0), axis=0, keepdims=True)
        s = sT * w_f if has_weight else sT
        # masked_fill_(diagonal, -10.0), already divided by T.
        s = jnp.where(d_eq, -10.0 * inv_T, s)
        _finish(s)

    @pl.when(ki != qi)
    def _off_tile():
        s = sT * w_f if has_weight else sT
        _finish(s)

    @pl.when(ki == nk - 1)
    def _finalize():
        lse = m_ref[...] + jnp.log(l_ref[...])       # logsumexp(l_neg / T)
        v = lse - pos_ref[...]                       # logsumexp((l_neg-l_pos)/T)
        # Forward value of exp(v - stop_grad(v)).
        lossvec_ref[0] = jnp.exp(v - v)
        # CE(target=0) on cat([l_pos, l_neg], 1)/T == softplus(v), stable.
        ce_ref[0] = jnp.maximum(v, 0.0) + jnp.log(1.0 + jnp.exp(-jnp.abs(v)))


def _vmem_capacity_bytes():
    try:
        return int(pltpu.get_tpu_info().vmem_capacity_bytes)
    except Exception:
        return 64 * 1024 * 1024   # conservative (v7x per-TC physical)


def _vmem_estimate(T, D, feat_isz, has_weight, w_isz, k_res_bytes):
    k_bytes = k_res_bytes if k_res_bytes else 2 * T * D * feat_isz
    return (2 * T * D * feat_isz            # q tiles, double-buffered
            + k_bytes                       # k (resident slab or streamed tile)
            + (2 * T * T * w_isz if has_weight else 0)
            + 2 * 2 * T * 4                 # two (1,1,T) f32 outputs, dbl-buf
            + 3 * 8 * T * 4                 # (1,T) scratch, sublane-padded
            + 6 * T * T * 4)                # sT + elementwise f32 temporaries


def _pick_tile(P_pad, D, feat_isz, has_weight, w_isz, k_res_bytes, budget):
    cands = (512, 384, 256, 128) if has_weight else (1024, 512, 384, 256, 128)
    for t in cands:
        if P_pad % t == 0 and _vmem_estimate(
                t, D, feat_isz, has_weight, w_isz, k_res_bytes) <= budget:
            return t
    return 128   # always divides P_pad


def patchnce_loss(feat_q, feat_k, weight=None, *, batch_size=2, nce_T=0.07,
                  nce_includes_all_negatives_from_minibatch=False):
    """Forward-pass equivalent of PatchNCELoss.forward. Returns a (N,) vector."""
    N, D = feat_q.shape
    B = 1 if nce_includes_all_negatives_from_minibatch else batch_size
    if N % B != 0:
        raise ValueError(f"N={N} not divisible by batch groups B={B}")
    P = N // B
    P_pad = ((P + 127) // 128) * 128      # lane-aligned, bounded tiles
    pad = P_pad - P

    q = feat_q.reshape(B, P, D)                        # keep input dtype
    k = lax.stop_gradient(feat_k).reshape(B, P, D)
    if pad:
        q = jnp.pad(q, ((0, 0), (0, pad), (0, 0)))
        k = jnp.pad(k, ((0, 0), (0, pad), (0, 0)))

    feat_isz = q.dtype.itemsize
    has_weight = weight is not None
    w_isz = feat_isz if has_weight else 0

    capacity = _vmem_capacity_bytes()
    budget = min(int(0.4 * capacity), 40 * 1024 * 1024)

    # Resident k when the full per-batch slab is small: amortizes k HBM traffic
    # nt-fold and lifts the no-weight path above the HBM roofline.
    k_block_bytes = P_pad * D * feat_isz
    k_resident = k_block_bytes <= 4 * 1024 * 1024
    k_res_bytes = 2 * k_block_bytes if k_resident else 0

    T = _pick_tile(P_pad, D, feat_isz, has_weight, w_isz, k_res_bytes, budget)
    nt = P_pad // T

    in_specs = [pl.BlockSpec((1, T, D), lambda b, qi, ki: (b, qi, 0))]
    if k_resident:
        in_specs.append(pl.BlockSpec((1, P_pad, D), lambda b, qi, ki: (b, 0, 0)))
    else:
        in_specs.append(pl.BlockSpec((1, T, D), lambda b, qi, ki: (b, ki, 0)))
    args = [q, k]

    if has_weight:
        w = jnp.asarray(weight)
        if w.ndim == 2:
            w = w[None]
        if w.shape[0] not in (1, B):
            raise ValueError(f"weight batch dim {w.shape[0]} incompatible with B={B}")
        if pad:
            w = jnp.pad(w, ((0, 0), (0, pad), (0, pad)))
        # Transpose once (kernel tile is (k, q)-ordered), store in the feature
        # dtype (bf16 halves the dominant byte stream), and pre-block into
        # contiguous (nt*nt, T, T) tiles so each weight DMA is contiguous.
        wt = jnp.swapaxes(w, -1, -2).astype(q.dtype)         # (Wb, P_pad, P_pad)
        Wb = wt.shape[0]
        wt_blk = wt.reshape(Wb, nt, T, nt, T).transpose(0, 1, 3, 2, 4)
        wt_blk = wt_blk.reshape(Wb * nt * nt, T, T)
        if Wb == 1:
            w_map = lambda b, qi, ki, _nt=nt: (ki * _nt + qi, 0, 0)
        else:
            w_map = lambda b, qi, ki, _nt=nt: ((b * _nt + ki) * _nt + qi, 0, 0)
        in_specs.append(pl.BlockSpec((1, T, T), w_map))
        args.append(wt_blk)

    kernel = functools.partial(
        _patchnce_kernel, inv_T=float(1.0 / nce_T), has_weight=has_weight,
        k_resident=k_resident, tile=T, p_real=P, mask_tail=(pad > 0))

    est = _vmem_estimate(T, D, feat_isz, has_weight, w_isz, k_res_bytes)
    vmem_limit = None
    if est > 12 * 1024 * 1024:
        # Generation-aware cap: never request the whole physical VMEM (v7x!).
        vmem_limit = int(min(2 * est, int(0.75 * capacity)))

    cost = pl.CostEstimate(
        flops=int(2 * B * P_pad * P_pad * D),
        transcendentals=int(B * P_pad * P_pad),
        bytes_accessed=int(B * P_pad * D * feat_isz
                           + (B if k_resident else B * nt) * P_pad * D * feat_isz
                           + (B * P_pad * P_pad * w_isz if has_weight else 0)
                           + 2 * B * P_pad * 4))

    loss_vec, ce = pl.pallas_call(
        kernel,
        out_shape=(jax.ShapeDtypeStruct((B, 1, P_pad), jnp.float32),
                   jax.ShapeDtypeStruct((B, 1, P_pad), jnp.float32)),
        grid_spec=pltpu.PrefetchScalarGridSpec(
            num_scalar_prefetch=0,
            grid=(B, nt, nt),
            in_specs=in_specs,
            out_specs=[pl.BlockSpec((1, 1, T), lambda b, qi, ki: (b, 0, qi)),
                       pl.BlockSpec((1, 1, T), lambda b, qi, ki: (b, 0, qi))],
            scratch_shapes=[pltpu.VMEM((1, T), jnp.float32)] * 3),
        compiler_params=pltpu.CompilerParams(
            dimension_semantics=("parallel", "parallel", "arbitrary"),
            vmem_limit_bytes=vmem_limit),
        cost_estimate=cost,
    )(*args)

    loss_vec = loss_vec.reshape(B, P_pad)[:, :P].reshape(-1)   # (N,)
    ce = ce.reshape(B, P_pad)[:, :P].reshape(-1)               # (N,)
    # loss = loss_vec.mean() - 1 + CELoss_dummy.detach()  -> shape (N,)
    return jnp.mean(loss_vec) - 1.0 + lax.stop_gradient(ce)


def _reference_loss(feat_q, feat_k, weight, batch_size, nce_T):
    """Pure-JAX port of the PyTorch forward for validation."""
    N, D = feat_q.shape
    B, P = batch_size, N // batch_size
    l_pos = jnp.sum(feat_q * feat_k, axis=1, keepdims=True)            # (N, 1)
    q = feat_q.reshape(B, P, D).astype(jnp.float32)
    k = feat_k.reshape(B, P, D).astype(jnp.float32)
    l_neg = jnp.einsum('bpd,bqd->bpq', q, k)
    if weight is not None:
        l_neg = l_neg * weight
    l_neg = jnp.where(jnp.eye(P, dtype=bool)[None], -10.0, l_neg).reshape(-1, P)
    logits = (l_neg - l_pos) / nce_T
    v = jax.scipy.special.logsumexp(logits, axis=1)
    loss_vec = jnp.exp(v - v)
    out_dummy = jnp.concatenate([l_pos, l_neg], axis=1) / nce_T
    ce = jax.scipy.special.logsumexp(out_dummy, axis=1) - out_dummy[:, 0]
    return jnp.mean(loss_vec) - 1.0 + ce


if __name__ == "__main__":
    # opt: batch_size=2, nce_T=0.07, nce_includes_all_negatives_from_minibatch=False
    batch_size = 2
    n_patches = 8
    dim = 32
    nce_T = 0.07
    N = batch_size * n_patches                    # feat_q: (16, 32)

    key = jax.random.PRNGKey(0)
    kq, kk, kw = jax.random.split(key, 3)
    feat_q = jax.random.normal(kq, (N, dim), dtype=jnp.float32)
    feat_k = jax.random.normal(kk, (N, dim), dtype=jnp.float32)
    # L2-normalize like the upstream PatchSampleF does (keeps logits in range)
    feat_q = feat_q / jnp.linalg.norm(feat_q, axis=1, keepdims=True)
    feat_k = feat_k / jnp.linalg.norm(feat_k, axis=1, keepdims=True)

    # weight=None path (specialized kernel: no weight stream at all)
    loss = patchnce_loss(feat_q, feat_k, batch_size=batch_size, nce_T=nce_T)
    loss = jax.block_until_ready(loss)
    ref = _reference_loss(feat_q, feat_k, None, batch_size, nce_T)
    assert loss.shape == (N,)
    assert jnp.allclose(loss, ref, rtol=1e-4, atol=1e-4), (loss, ref)

    # weighted path (one (P, P) weight shared across batch groups)
    P = N // batch_size
    w = 0.5 + jax.random.uniform(kw, (P, P), dtype=jnp.float32)
    loss_w = patchnce_loss(feat_q, feat_k, w, batch_size=batch_size, nce_T=nce_T)
    loss_w = jax.block_until_ready(loss_w)
    ref_w = _reference_loss(feat_q, feat_k, w, batch_size, nce_T)
    assert jnp.allclose(loss_w, ref_w, rtol=1e-4, atol=1e-4), (loss_w, ref_w)

    print("KERNEL_OK")
</pallas_src>

<mosaic_0001>
module attributes {stable_mosaic.version = 11 : i64} {
  func.func @_patchnce_kernel(%arg0: i32, %arg1: i32, %arg2: i32, %arg3: memref<1x128x32xf32, #tpu.memory_space<vmem>>, %arg4: memref<1x128x32xf32, #tpu.memory_space<vmem>>, %arg5: memref<1x1x128xf32, #tpu.memory_space<vmem>>, %arg6: memref<1x1x128xf32, #tpu.memory_space<vmem>>, %arg7: memref<1x128xf32, #tpu.memory_space<vmem>>, %arg8: memref<1x128xf32, #tpu.memory_space<vmem>>, %arg9: memref<1x128xf32, #tpu.memory_space<vmem>>) attributes {dimension_semantics = [#tpu.dimension_semantics<parallel>, #tpu.dimension_semantics<parallel>, #tpu.dimension_semantics<arbitrary>], iteration_bounds = array<i64: 2, 1, 1>, scalar_prefetch = 0 : i64, scratch_operands = 3 : i64, tpu.core_type = #tpu.core_type<tc>, window_params = [{transform_indices = @transform_0, window_bounds = array<i64: 1, 128, 32>}, {transform_indices = @transform_1, window_bounds = array<i64: 1, 128, 32>}, {transform_indices = @transform_2, window_bounds = array<i64: 1, 1, 128>}, {transform_indices = @transform_3, window_bounds = array<i64: 1, 1, 128>}]} {
    %c0 = arith.constant 0 : index
    %c0_0 = arith.constant 0 : index
    %c0_1 = arith.constant 0 : index
    %0 = vector.load %arg3[%c0, %c0_0, %c0_1] : memref<1x128x32xf32, #tpu.memory_space<vmem>>, vector<1x128x32xf32>
    %1 = vector.shape_cast %0 : vector<1x128x32xf32> to vector<128x32xf32>
    %c128_i32 = arith.constant 128 : i32
    %2 = arith.muli %arg2, %c128_i32 : i32
    %3 = tpu.assume_multiple %2, 128 : i32
    %c0_2 = arith.constant 0 : index
    %4 = arith.index_cast %3 : i32 to index
    %c0_3 = arith.constant 0 : index
    %5 = vector.load %arg4[%c0_2, %4, %c0_3] : memref<1x128x32xf32, #tpu.memory_space<vmem>>, vector<1x128x32xf32>
    %6 = vector.shape_cast %5 : vector<1x128x32xf32> to vector<128x32xf32>
    %cst = arith.constant 14.2857141 : f32
    %7 = vector.broadcast %cst : f32 to vector<128x32xf32>
    %8 = arith.mulf %1, %7 : vector<128x32xf32>
    %cst_4 = arith.constant dense<0.000000e+00> : vector<128x128xf32>
    %9 = tpu.matmul %6, %8, %cst_4 {dimension_numbers = #tpu.dot_dimension_numbers<[1], [1], [0], [0], [0, 0, 1, 0], [], []>} : vector<128x32xf32>, vector<128x32xf32>, vector<128x128xf32> -> vector<128x128xf32>
    %c128_i32_5 = arith.constant 128 : i32
    %10 = arith.muli %arg2, %c128_i32_5 : i32
    %11 = tpu.iota {dimensions = array<i32: 0>} : vector<128x128xi32>
    %12 = vector.broadcast %10 : i32 to vector<128x128xi32>
    %13 = arith.addi %12, %11 : vector<128x128xi32>
    %c8_i32 = arith.constant 8 : i32
    %14 = vector.broadcast %c8_i32 : i32 to vector<128x128xi32>
    %15 = arith.cmpi slt, %13, %14 : vector<128x128xi32>
    %c0_i32 = arith.constant 0 : i32
    %16 = arith.cmpi eq, %arg2, %c0_i32 : i32
    %17 = arith.extui %16 : i1 to i32
    %c0_i32_6 = arith.constant 0 : i32
    %18 = arith.cmpi ne, %17, %c0_i32_6 : i32
    scf.if %18 {
      %cst_11 = arith.constant 0xFF800000 : f32
      %28 = vector.broadcast %cst_11 : f32 to vector<1x128xf32>
      %c0_12 = arith.constant 0 : index
      %c0_13 = arith.constant 0 : index
      %29 = vector.load %arg7[%c0_12, %c0_13] : memref<1x128xf32, #tpu.memory_space<vmem>>, vector<1x128xf32>
      tpu.vector_store %arg7[%c0_12, %c0_13], %28 {strides = array<i32>} : memref<1x128xf32, #tpu.memory_space<vmem>>, vector<1x128xf32>,
      %cst_14 = arith.constant 0.000000e+00 : f32
      %30 = vector.broadcast %cst_14 : f32 to vector<1x128xf32>
      %c0_15 = arith.constant 0 : index
      %c0_16 = arith.constant 0 : index
      %31 = vector.load %arg8[%c0_15, %c0_16] : memref<1x128xf32, #tpu.memory_space<vmem>>, vector<1x128xf32>
      tpu.vector_store %arg8[%c0_15, %c0_16], %30 {strides = array<i32>} : memref<1x128xf32, #tpu.memory_space<vmem>>, vector<1x128xf32>,
    } else {
    }
    %19 = arith.cmpi eq, %arg2, %arg1 : i32
    %20 = arith.extui %19 : i1 to i32
    %c0_i32_7 = arith.constant 0 : i32
    %21 = arith.cmpi ne, %20, %c0_i32_7 : i32
    scf.if %21 {
      %28 = tpu.iota {dimensions = array<i32: 0>} : vector<128x128xi32>
      %29 = tpu.iota {dimensions = array<i32: 1>} : vector<128x128xi32>
      %30 = arith.cmpi eq, %28, %29 : vector<128x128xi32>
      %cst_11 = arith.constant 0.000000e+00 : f32
      %31 = vector.broadcast %cst_11 : f32 to vector<128x128xf32>
      %32 = arith.select %30, %9, %31 : vector<128x128xi1>, vector<128x128xf32>
      %cst_12 = arith.constant dense<0.000000e+00> : vector<128xf32>
      %33 = vector.multi_reduction <add>, %32, %cst_12 [0] : vector<128x128xf32> to vector<128xf32>
      %34 = vector.shape_cast %33 : vector<128xf32> to vector<1x128xf32>
      %c0_13 = arith.constant 0 : index
      %c0_14 = arith.constant 0 : index
      %35 = vector.load %arg9[%c0_13, %c0_14] : memref<1x128xf32, #tpu.memory_space<vmem>>, vector<1x128xf32>
      tpu.vector_store %arg9[%c0_13, %c0_14], %34 {strides = array<i32>} : memref<1x128xf32, #tpu.memory_space<vmem>>, vector<1x128xf32>,
      %cst_15 = arith.constant -142.857147 : f32
      %36 = vector.broadcast %cst_15 : f32 to vector<128x128xf32>
      %37 = arith.select %30, %36, %9 : vector<128x128xi1>, vector<128x128xf32>
      %cst_16 = arith.constant -1.000000e+30 : f32
      %38 = vector.broadcast %cst_16 : f32 to vector<128x128xf32>
      %39 = arith.select %15, %37, %38 : vector<128x128xi1>, vector<128x128xf32>
      %c0_17 = arith.constant 0 : index
      %c0_18 = arith.constant 0 : index
      %40 = vector.load %arg7[%c0_17, %c0_18] : memref<1x128xf32, #tpu.memory_space<vmem>>, vector<1x128xf32>
      %cst_19 = arith.constant dense<0xFF800000> : vector<128xf32>
      %41 = vector.multi_reduction <maximumf>, %39, %cst_19 [0] : vector<128x128xf32> to vector<128xf32>
      %42 = vector.shape_cast %41 : vector<128xf32> to vector<1x128xf32>
      %43 = arith.maximumf %40, %42 : vector<1x128xf32>
      %c0_20 = arith.constant 0 : index
      %c0_21 = arith.constant 0 : index
      %44 = vector.load %arg8[%c0_20, %c0_21] : memref<1x128xf32, #tpu.memory_space<vmem>>, vector<1x128xf32>
      %45 = arith.subf %40, %43 : vector<1x128xf32>
      %46 = math.exp %45 : vector<1x128xf32>
      %47 = arith.mulf %44, %46 : vector<1x128xf32>
      %48 = vector.broadcast %43 : vector<1x128xf32> to vector<128x128xf32>
      %49 = arith.subf %39, %48 : vector<128x128xf32>
      %50 = math.exp %49 : vector<128x128xf32>
      %cst_22 = arith.constant dense<0.000000e+00> : vector<128xf32>
      %51 = vector.multi_reduction <add>, %50, %cst_22 [0] : vector<128x128xf32> to vector<128xf32>
      %52 = vector.shape_cast %51 : vector<128xf32> to vector<1x128xf32>
      %53 = arith.addf %47, %52 : vector<1x128xf32>
      %c0_23 = arith.constant 0 : index
      %c0_24 = arith.constant 0 : index
      %54 = vector.load %arg8[%c0_23, %c0_24] : memref<1x128xf32, #tpu.memory_space<vmem>>, vector<1x128xf32>
      tpu.vector_store %arg8[%c0_23, %c0_24], %53 {strides = array<i32>} : memref<1x128xf32, #tpu.memory_space<vmem>>, vector<1x128xf32>,
      %c0_25 = arith.constant 0 : index
      %c0_26 = arith.constant 0 : index
      %55 = vector.load %arg7[%c0_25, %c0_26] : memref<1x128xf32, #tpu.memory_space<vmem>>, vector<1x128xf32>
      tpu.vector_store %arg7[%c0_25, %c0_26], %43 {strides = array<i32>} : memref<1x128xf32, #tpu.memory_space<vmem>>, vector<1x128xf32>,
    } else {
    }
    %22 = arith.cmpi ne, %arg2, %arg1 : i32
    %23 = arith.extui %22 : i1 to i32
    %c0_i32_8 = arith.constant 0 : i32
    %24 = arith.cmpi ne, %23, %c0_i32_8 : i32
    scf.if %24 {
      %cst_11 = arith.constant -1.000000e+30 : f32
      %28 = vector.broadcast %cst_11 : f32 to vector<128x128xf32>
      %29 = arith.select %15, %9, %28 : vector<128x128xi1>, vector<128x128xf32>
      %c0_12 = arith.constant 0 : index
      %c0_13 = arith.constant 0 : index
      %30 = vector.load %arg7[%c0_12, %c0_13] : memref<1x128xf32, #tpu.memory_space<vmem>>, vector<1x128xf32>
      %cst_14 = arith.constant dense<0xFF800000> : vector<128xf32>
      %31 = vector.multi_reduction <maximumf>, %29, %cst_14 [0] : vector<128x128xf32> to vector<128xf32>
      %32 = vector.shape_cast %31 : vector<128xf32> to vector<1x128xf32>
      %33 = arith.maximumf %30, %32 : vector<1x128xf32>
      %c0_15 = arith.constant 0 : index
      %c0_16 = arith.constant 0 : index
      %34 = vector.load %arg8[%c0_15, %c0_16] : memref<1x128xf32, #tpu.memory_space<vmem>>, vector<1x128xf32>
      %35 = arith.subf %30, %33 : vector<1x128xf32>
      %36 = math.exp %35 : vector<1x128xf32>
      %37 = arith.mulf %34, %36 : vector<1x128xf32>
      %38 = vector.broadcast %33 : vector<1x128xf32> to vector<128x128xf32>
      %39 = arith.subf %29, %38 : vector<128x128xf32>
      %40 = math.exp %39 : vector<128x128xf32>
      %cst_17 = arith.constant dense<0.000000e+00> : vector<128xf32>
      %41 = vector.multi_reduction <add>, %40, %cst_17 [0] : vector<128x128xf32> to vector<128xf32>
      %42 = vector.shape_cast %41 : vector<128xf32> to vector<1x128xf32>
      %43 = arith.addf %37, %42 : vector<1x128xf32>
      %c0_18 = arith.constant 0 : index
      %c0_19 = arith.constant 0 : index
      %44 = vector.load %arg8[%c0_18, %c0_19] : memref<1x128xf32, #tpu.memory_space<vmem>>, vector<1x128xf32>
      tpu.vector_store %arg8[%c0_18, %c0_19], %43 {strides = array<i32>} : memref<1x128xf32, #tpu.memory_space<vmem>>, vector<1x128xf32>,
      %c0_20 = arith.constant 0 : index
      %c0_21 = arith.constant 0 : index
      %45 = vector.load %arg7[%c0_20, %c0_21] : memref<1x128xf32, #tpu.memory_space<vmem>>, vector<1x128xf32>
      tpu.vector_store %arg7[%c0_20, %c0_21], %33 {strides = array<i32>} : memref<1x128xf32, #tpu.memory_space<vmem>>, vector<1x128xf32>,
    } else {
    }
    %c0_i32_9 = arith.constant 0 : i32
    %25 = arith.cmpi eq, %arg2, %c0_i32_9 : i32
    %26 = arith.extui %25 : i1 to i32
    %c0_i32_10 = arith.constant 0 : i32
    %27 = arith.cmpi ne, %26, %c0_i32_10 : i32
    scf.if %27 {
      %c0_11 = arith.constant 0 : index
      %c0_12 = arith.constant 0 : index
      %28 = vector.load %arg7[%c0_11, %c0_12] : memref<1x128xf32, #tpu.memory_space<vmem>>, vector<1x128xf32>
      %c0_13 = arith.constant 0 : index
      %c0_14 = arith.constant 0 : index
      %29 = vector.load %arg8[%c0_13, %c0_14] : memref<1x128xf32, #tpu.memory_space<vmem>>, vector<1x128xf32>
      %30 = math.log %29 : vector<1x128xf32>
      %31 = arith.addf %28, %30 : vector<1x128xf32>
      %c0_15 = arith.constant 0 : index
      %c0_16 = arith.constant 0 : index
      %32 = vector.load %arg9[%c0_15, %c0_16] : memref<1x128xf32, #tpu.memory_space<vmem>>, vector<1x128xf32>
      %33 = arith.subf %31, %32 : vector<1x128xf32>
      %34 = arith.subf %33, %33 : vector<1x128xf32>
      %35 = math.exp %34 : vector<1x128xf32>
      %c0_17 = arith.constant 0 : index
      %c0_18 = arith.constant 0 : index
      %c0_19 = arith.constant 0 : index
      %36 = vector.load %arg5[%c0_17, %c0_18, %c0_19] : memref<1x1x128xf32, #tpu.memory_space<vmem>>, vector<1x1x128xf32>
      %37 = vector.shape_cast %36 : vector<1x1x128xf32> to vector<1x128xf32>
      %38 = vector.shape_cast %35 : vector<1x128xf32> to vector<1x1x128xf32>
      tpu.vector_store %arg5[%c0_17, %c0_18, %c0_19], %38 {strides = array<i32>} : memref<1x1x128xf32, #tpu.memory_space<vmem>>, vector<1x1x128xf32>,
      %cst_20 = arith.constant 0.000000e+00 : f32
      %39 = vector.broadcast %cst_20 : f32 to vector<1x128xf32>
      %40 = arith.maximumf %33, %39 : vector<1x128xf32>
      %41 = math.absf %33 : vector<1x128xf32>
      %cst_21 = arith.constant 0.000000e+00 : f32
      %42 = vector.broadcast %cst_21 : f32 to vector<1x128xf32>
      %43 = arith.subf %42, %41 : vector<1x128xf32>
      %44 = math.exp %43 : vector<1x128xf32>
      %cst_22 = arith.constant 1.000000e+00 : f32
      %45 = vector.broadcast %cst_22 : f32 to vector<1x128xf32>
      %46 = arith.addf %45, %44 : vector<1x128xf32>
      %47 = math.log %46 : vector<1x128xf32>
      %48 = arith.addf %40, %47 : vector<1x128xf32>
      %c0_23 = arith.constant 0 : index
      %c0_24 = arith.constant 0 : index
      %c0_25 = arith.constant 0 : index
      %49 = vector.load %arg6[%c0_23, %c0_24, %c0_25] : memref<1x1x128xf32, #tpu.memory_space<vmem>>, vector<1x1x128xf32>
      %50 = vector.shape_cast %49 : vector<1x1x128xf32> to vector<1x128xf32>
      %51 = vector.shape_cast %48 : vector<1x128xf32> to vector<1x1x128xf32>
      tpu.vector_store %arg6[%c0_23, %c0_24, %c0_25], %51 {strides = array<i32>} : memref<1x1x128xf32, #tpu.memory_space<vmem>>, vector<1x1x128xf32>,
    } else {
    }
    return
  }
  func.func @transform_0(%arg0: i32, %arg1: i32, %arg2: i32) -> (i32, i32, i32) {
    %c0_i32 = arith.constant 0 : i32
    %c0_i32_0 = arith.constant 0 : i32
    return %arg0, %arg1, %c0_i32 : i32, i32, i32
  }
  func.func @transform_1(%arg0: i32, %arg1: i32, %arg2: i32) -> (i32, i32, i32) {
    %c0_i32 = arith.constant 0 : i32
    %c0_i32_0 = arith.constant 0 : i32
    %c0_i32_1 = arith.constant 0 : i32
    return %arg0, %c0_i32, %c0_i32_0 : i32, i32, i32
  }
  func.func @transform_2(%arg0: i32, %arg1: i32, %arg2: i32) -> (i32, i32, i32) {
    %c0_i32 = arith.constant 0 : i32
    %c0_i32_0 = arith.constant 0 : i32
    return %arg0, %c0_i32, %arg1 : i32, i32, i32
  }
  func.func @transform_3(%arg0: i32, %arg1: i32, %arg2: i32) -> (i32, i32, i32) {
    %c0_i32 = arith.constant 0 : i32
    %c0_i32_0 = arith.constant 0 : i32
    return %arg0, %c0_i32, %arg1 : i32, i32, i32
  }
}

</mosaic_0001>

<llo_original>
// kernel: tpu_custom_call.1
$region0: #{tpu_custom_call.1}
  #allocation0 [shape = 'u32[]', space=smem, size = 0x4, offset = 0x4, fixed_abs, tag = 'smem constant byte address 0x4 - core index']
  #allocation1 [shape = 'u32[72,128]{1,0:T(1,128)}', space=vmem, size = 0x9000, scoped, tag = 'internal scratch']
  #allocation2 [shape = 'f32[1,128]{1,0:T(1,128)}', space=vmem, size = 0x200, scoped, tag = 'scratch operand']
  #allocation3 [shape = 'f32[1,128]{1,0:T(1,128)}', space=vmem, size = 0x200, scoped, tag = 'scratch operand']
  #allocation4 [shape = 'f32[1,128]{1,0:T(1,128)}', space=vmem, size = 0x200, scoped, tag = 'scratch operand']
  %s0 = inlined_call_operand.vmem [shape: f32[2,128,32], index: 0, kind: input, shape index: {}]
  %s1 = inlined_call_operand.vmem [shape: f32[2,128,32], index: 1, kind: input, shape index: {}]
  %s2 = inlined_call_operand.hbm [shape: f32[2,1,128], index: 2, kind: output, shape index: {0}]
  %s3 = inlined_call_operand.hbm [shape: f32[2,1,128], index: 3, kind: output, shape index: {1}]
  %4 = xla_tuple %s2, %s3
  %s5 = sld [smem:[#allocation0]]
  $region65: #{tpu_custom_call.1} parent=0
    _
  %s7 = ssub.s32 1, %s5
  %s8 = scalar_select 0, %s7, %s5
  $region1: #{tpu_custom_call.1} parent=0
    #allocation5 [shape = 'u8[1024]{0}', space=vmem, size = 0x400, scoped, tag = 'output window, operand 0']
    #allocation6 [shape = 's32[2]{0}', space=sflag, size = 0x8, scoped, tag = 'scoped memory for tpu_custom_call.1']
    #allocation7 [shape = 'u8[1024]{0}', space=vmem, size = 0x400, scoped, tag = 'output window, operand 1']
    #allocation8 [shape = 's32[2]{0}', space=sflag, size = 0x8, scoped, tag = 'scoped memory for tpu_custom_call.1']
    %9 = vsyncpa [#allocation6], 0
    %s10 = scalar_lea.sflag [#allocation6], 1
    %11 = vsyncpa %s10, 0
    %12 = vsyncpa [#allocation8], 0
    %s13 = scalar_lea.sflag [#allocation8], 1
    %14 = vsyncpa %s13, 0
    loop: start=0, step=1, limit=4
    $region2: #{tpu_custom_call.1} parent=1 // loop_pre_header
      _
    $region3: #{tpu_custom_call.1} parent=1 // loop_header
      %s16 = sphi 0, %s20
      %p17 = scmp.ge.s32.totalorder %s16, 4
      %s23 = sphi 0, %s42
      %s24 = sphi 0, %s38
      %s25 = sphi 0, %s34
      %s26 = sphi 0, %s23
      %s27 = sphi 0, %s24
      %s28 = sphi 0, %s25
      %s29 = sphi 0, %s26
      %s30 = sphi 0, %s27
      %s31 = sphi 0, %s28
      %s47 = sphi 0, %s49
      %s50 = sphi 0, %s47
      %s51 = sphi 0, %s50
      %s67 = sphi 0, %s51
      %s73 = sphi 0, %s75
      %s76 = sphi 0, %s73
      %s77 = sphi 0, %s76
      %s93 = sphi 0, %s77
      %s101 = sphi 0, %s103
      %s104 = sphi 0, %s101
      %s105 = sphi 0, %s104
      %s121 = sphi 0, %s105
      %s129 = sphi 0, %s131
      %s132 = sphi 0, %s129
      %s133 = sphi 0, %s132
      %s149 = sphi 0, %s133
    $region4: #{tpu_custom_call.1} parent=1 // loop_header_branch
      %19 = sbr.rel (%p17) target = $region8
    $region5: #{tpu_custom_call.1} parent=1 // loop_body
      %s21 = ssub.s32 %s16, 1
      %s22 = ssub.s32 %s16, 2
      %s32 = sadd.s32 1, %s25
      %p33 = scmp.ge.s32.totalorder %s32, 1
      %s34 = scalar_select %p33, 0, %s32
      %s35 = sadd.s32 1, %s24
      %s36 = scalar_select %p33, %s35, %s24
      %p37 = scmp.ge.s32.totalorder %s36, 1
      %s38 = scalar_select %p37, 0, %s36
      %s39 = sadd.s32 1, %s23
      %s40 = scalar_select %p37, %s39, %s23
      %p41 = scmp.ge.s32.totalorder %s40, 2
      %s42 = scalar_select %p41, 0, %s40
      %s43 = ssub.s32 %s23, %s42
      %s44 = ssub.s32 %s24, %s38
      %s45 = sor.u32 %s43, %s44
      %p46 = scmp.eq.s32.totalorder %s45, 0
      %s48 = sadd.s32 %s47, 1
      %s49 = scalar_select %p46, %s47, %s48
      %p52 = pneg %p46
      %p53 = scmp.eq.s32.totalorder %s16, 1
      %p54 = por %p52, %p53
      %p55 = scmp.ne.s32.totalorder %s47, %s50
      %p56 = scmp.eq.s32.totalorder %s16, 0
      %p57 = por %p55, %p56
      %p58 = scmp.ne.s32.totalorder %s47, %s50
      %p59 = scmp.eq.s32.totalorder %s21, 1
      %p60 = por %p58, %p59
      %p61 = scmp.ne.s32.totalorder %s50, %s51
      %p62 = scmp.eq.s32.totalorder %s21, 0
      %p63 = por %p61, %p62
      %p64 = scmp.ne.s32.totalorder %s50, %s51
      %p65 = scmp.eq.s32.totalorder %s22, 1
      %p66 = por %p64, %p65
      %p68 = scmp.ne.s32.totalorder %s51, %s67
      %p69 = scmp.eq.s32.totalorder %s22, 0
      %p70 = por %p68, %p69
      %s71 = ssub.s32 %s23, %s42
      %p72 = scmp.eq.s32.totalorder %s71, 0
      %s74 = sadd.s32 %s73, 1
      %s75 = scalar_select %p72, %s73, %s74
      %p78 = pneg %p72
      %p79 = scmp.eq.s32.totalorder %s16, 1
      %p80 = por %p78, %p79
      %p81 = scmp.ne.s32.totalorder %s73, %s76
      %p82 = scmp.eq.s32.totalorder %s16, 0
      %p83 = por %p81, %p82
      %p84 = scmp.ne.s32.totalorder %s73, %s76
      %p85 = scmp.eq.s32.totalorder %s21, 1
      %p86 = por %p84, %p85
      %p87 = scmp.ne.s32.totalorder %s76, %s77
      %p88 = scmp.eq.s32.totalorder %s21, 0
      %p89 = por %p87, %p88
      %p90 = scmp.ne.s32.totalorder %s76, %s77
      %p91 = scmp.eq.s32.totalorder %s22, 1
      %p92 = por %p90, %p91
      %p94 = scmp.ne.s32.totalorder %s77, %s93
      %p95 = scmp.eq.s32.totalorder %s22, 0
      %p96 = por %p94, %p95
      %s97 = ssub.s32 %s23, %s42
      %s98 = ssub.s32 %s24, %s38
      %s99 = sor.u32 %s97, %s98
      %p100 = scmp.eq.s32.totalorder %s99, 0
      %s102 = sadd.s32 %s101, 1
      %s103 = scalar_select %p100, %s101, %s102
      %p106 = pneg %p100
      %p107 = scmp.eq.s32.totalorder %s16, 1
      %p108 = por %p106, %p107
      %p109 = scmp.ne.s32.totalorder %s101, %s104
      %p110 = scmp.eq.s32.totalorder %s16, 0
      %p111 = por %p109, %p110
      %p112 = scmp.ne.s32.totalorder %s101, %s104
      %p113 = scmp.eq.s32.totalorder %s21, 1
      %p114 = por %p112, %p113
      %p115 = scmp.ne.s32.totalorder %s104, %s105
      %p116 = scmp.eq.s32.totalorder %s21, 0
      %p117 = por %p115, %p116
      %p118 = scmp.ne.s32.totalorder %s104, %s105
      %p119 = scmp.eq.s32.totalorder %s22, 1
      %p120 = por %p118, %p119
      %p122 = scmp.ne.s32.totalorder %s105, %s121
      %p123 = scmp.eq.s32.totalorder %s22, 0
      %p124 = por %p122, %p123
      %s125 = ssub.s32 %s23, %s42
      %s126 = ssub.s32 %s24, %s38
      %s127 = sor.u32 %s125, %s126
      %p128 = scmp.eq.s32.totalorder %s127, 0
      %s130 = sadd.s32 %s129, 1
      %s131 = scalar_select %p128, %s129, %s130
      %p134 = pneg %p128
      %p135 = scmp.eq.s32.totalorder %s16, 1
      %p136 = por %p134, %p135
      %p137 = scmp.ne.s32.totalorder %s129, %s132
      %p138 = scmp.eq.s32.totalorder %s16, 0
      %p139 = por %p137, %p138
      %p140 = scmp.ne.s32.totalorder %s129, %s132
      %p141 = scmp.eq.s32.totalorder %s21, 1
      %p142 = por %p140, %p141
      %p143 = scmp.ne.s32.totalorder %s132, %s133
      %p144 = scmp.eq.s32.totalorder %s21, 0
      %p145 = por %p143, %p144
      %p146 = scmp.ne.s32.totalorder %s132, %s133
      %p147 = scmp.eq.s32.totalorder %s22, 1
      %p148 = por %p146, %p147
      %p150 = scmp.ne.s32.totalorder %s133, %s149
      %p151 = scmp.eq.s32.totalorder %s22, 0
      %p152 = por %p150, %p151
      %p153 = scmp.le.s32.totalorder 1, %s16
      %p154 = scmp.lt.s32.totalorder %s16, 3
      %p155 = pnand %p153, %p154
      %p156 = pneg %p155
      // Predicated region
      $region9: #{tpu_custom_call.1} parent=5 // pred_check
        _
      $region10: #{tpu_custom_call.1} parent=5 // pred_check_branch
        %158 = sbr.rel (%p155) target = $region12
      $region11: #{tpu_custom_call.1} parent=5 // pred_region
        %s159 = ssub.s32 %s16, 1
      $region12: #{tpu_custom_call.1} parent=5 // pred_fallthru
        _
      %p160 = scmp.lt.s32.totalorder %s16, 2
      // Predicated region
      $region13: #{tpu_custom_call.1} parent=5 // pred_check
        %p161 = pneg %p160
      $region14: #{tpu_custom_call.1} parent=5 // pred_check_branch
        %163 = sbr.rel (%p161) target = $region16
      $region15: #{tpu_custom_call.1} parent=5 // pred_region
        // Predicated region
        $region17: #{tpu_custom_call.1} parent=15 // pred_check
          %p164 = pneg %p57
        $region18: #{tpu_custom_call.1} parent=15 // pred_check_branch
          %166 = sbr.rel (%p164) target = $region20
        $region19: #{tpu_custom_call.1} parent=15 // pred_region
          %s167 = smul.u32 16, %s24
          %p168 = scmp.lt.s32.totalorder %s23, 1
          %s169 = scalar_select %p168, %s23, 1
          %p170 = scmp.lt.s32.totalorder %s167, 15
          %s171 = scalar_select %p170, %s167, 15
          %s172 = smul.addr %s169, 16
          %s173 = sadd.s32 %s171, %s172
          %s174 = smul.addr %s173, 8
          %s175 = scalar_lea.vmem %s0, %s174
          %s176 = smul.u32 16, %s24
        $region20: #{tpu_custom_call.1} parent=15 // pred_fallthru
          _
        // Predicated region
        $region21: #{tpu_custom_call.1} parent=15 // pred_check
          %p177 = pneg %p83
        $region22: #{tpu_custom_call.1} parent=15 // pred_check_branch
          %179 = sbr.rel (%p177) target = $region24
        $region23: #{tpu_custom_call.1} parent=15 // pred_region
          %p180 = scmp.lt.s32.totalorder %s23, 1
          %s181 = scalar_select %p180, %s23, 1
          %s182 = smul.addr %s181, 16
          %s183 = smul.addr %s182, 8
          %s184 = scalar_lea.vmem %s1, %s183
        $region24: #{tpu_custom_call.1} parent=15 // pred_fallthru
          _
      $region16: #{tpu_custom_call.1} parent=5 // pred_fallthru
        _
      %p185 = scmp.le.s32.totalorder 1, %s16
      %p186 = scmp.lt.s32.totalorder %s16, 3
      %p187 = pnand %p185, %p186
      %p188 = pneg %p187
      // Predicated region
      $region25: #{tpu_custom_call.1} parent=5 // pred_check
        _
      $region26: #{tpu_custom_call.1} parent=5 // pred_check_branch
        %190 = sbr.rel (%p187) target = $region28
      $region27: #{tpu_custom_call.1} parent=5 // pred_region
        %s191 = ssub.s32 %s16, 1
        %s192 = smul.u32 16, %s27
        %p193 = scmp.lt.s32.totalorder %s26, 1
        %s194 = scalar_select %p193, %s26, 1
        %p195 = scmp.lt.s32.totalorder %s192, 15
        %s196 = scalar_select %p195, %s192, 15
        %s197 = smul.addr %s194, 16
        %s198 = sadd.s32 %s196, %s197
        %s199 = smul.addr %s198, 8
        %s200 = scalar_lea.vmem %s0, %s199
        %p201 = pneg %p63
        %p202 = pneg %p60
        %p203 = scmp.lt.s32.totalorder %s26, 1
        %s204 = scalar_select %p203, %s26, 1
        %s205 = smul.addr %s204, 16
        %s206 = smul.addr %s205, 8
        %s207 = scalar_lea.vmem %s1, %s206
        %p208 = pneg %p89
        %p209 = pneg %p86
        %p210 = pneg %p117
        %p211 = pneg %p114
        %s212 = sand.u32 %s104, 1
        %s213 = scalar_lea.sflag [#allocation6], %s212
        %s214 = sand.u32 %s104, 1
        %s215 = scalar_lea.vmem [#allocation5], %s214
        %p216 = pneg %p145
        %p217 = pneg %p142
        %s218 = sand.u32 %s132, 1
        %s219 = scalar_lea.sflag [#allocation8], %s218
        %s220 = sand.u32 %s132, 1
        %s221 = scalar_lea.vmem [#allocation7], %s220
        %s222 = smul.u32 16, %s27
        %p223 = scmp.lt.s32.totalorder %s26, 1
        %s224 = scalar_select %p223, %s26, 1
        %p225 = scmp.lt.s32.totalorder %s222, 15
        %s226 = scalar_select %p225, %s222, 15
        %s227 = smul.addr %s224, 16
        %s228 = sadd.s32 %s226, %s227
        %s229 = smul.addr %s228, 8
        %s230 = scalar_lea.vmem %s0, %s229
        %s231 = smul.u32 16, %s27
        %p232 = scmp.lt.s32.totalorder %s26, 1
        %s233 = scalar_select %p232, %s26, 1
        %s234 = smul.addr %s233, 16
        %s235 = smul.addr %s234, 8
        %s236 = scalar_lea.vmem %s1, %s235
        %v237 = vld [vmem:[%s230] sm:$0xff]
        %v238 = vld [vmem:[%s230 + $0x8] sm:$0xff]
        %v239 = vld [vmem:[%s230 + $0x10] sm:$0xff]
        %v240 = vld [vmem:[%s230 + $0x18] sm:$0xff]
        %v241 = vld [vmem:[%s230 + $0x20] sm:$0xff]
        %v242 = vld [vmem:[%s230 + $0x28] sm:$0xff]
        %v243 = vld [vmem:[%s230 + $0x30] sm:$0xff]
        %v244 = vld [vmem:[%s230 + $0x38] sm:$0xff]
        %v245 = vld [vmem:[%s230 + $0x40] sm:$0xff]
        %v246 = vld [vmem:[%s230 + $0x48] sm:$0xff]
        %v247 = vld [vmem:[%s230 + $0x50] sm:$0xff]
        %v248 = vld [vmem:[%s230 + $0x58] sm:$0xff]
        %v249 = vld [vmem:[%s230 + $0x60] sm:$0xff]
        %v250 = vld [vmem:[%s230 + $0x68] sm:$0xff]
        %v251 = vld [vmem:[%s230 + $0x70] sm:$0xff]
        %v252 = vld [vmem:[%s230 + $0x78] sm:$0xff]
        %s253 = smul.u32 %s28, 128
        %s254 = scalar_lea.vmem %s236, %s253
        %v255 = vld [vmem:[%s254] sm:$0xff]
        %v256 = vld [vmem:[%s254 + $0x8] sm:$0xff]
        %v257 = vld [vmem:[%s254 + $0x10] sm:$0xff]
        %v258 = vld [vmem:[%s254 + $0x18] sm:$0xff]
        %v259 = vld [vmem:[%s254 + $0x20] sm:$0xff]
        %v260 = vld [vmem:[%s254 + $0x28] sm:$0xff]
        %v261 = vld [vmem:[%s254 + $0x30] sm:$0xff]
        %v262 = vld [vmem:[%s254 + $0x38] sm:$0xff]
        %v263 = vld [vmem:[%s254 + $0x40] sm:$0xff]
        %v264 = vld [vmem:[%s254 + $0x48] sm:$0xff]
        %v265 = vld [vmem:[%s254 + $0x50] sm:$0xff]
        %v266 = vld [vmem:[%s254 + $0x58] sm:$0xff]
        %v267 = vld [vmem:[%s254 + $0x60] sm:$0xff]
        %v268 = vld [vmem:[%s254 + $0x68] sm:$0xff]
        %v269 = vld [vmem:[%s254 + $0x70] sm:$0xff]
        %v270 = vld [vmem:[%s254 + $0x78] sm:$0xff]
        %v271 = vmul.f32 %v237, 14.285714
        %v272 = vmul.f32 %v238, 14.285714
        %v273 = vmul.f32 %v239, 14.285714
        %v274 = vmul.f32 %v240, 14.285714
        %v275 = vmul.f32 %v241, 14.285714
        %v276 = vmul.f32 %v242, 14.285714
        %v277 = vmul.f32 %v243, 14.285714
        %v278 = vmul.f32 %v244, 14.285714
        %v279 = vmul.f32 %v245, 14.285714
        %v280 = vmul.f32 %v246, 14.285714
        %v281 = vmul.f32 %v247, 14.285714
        %v282 = vmul.f32 %v248, 14.285714
        %v283 = vmul.f32 %v249, 14.285714
        %v284 = vmul.f32 %v250, 14.285714
        %v285 = vmul.f32 %v251, 14.285714
        %v286 = vmul.f32 %v252, 14.285714
        %vm287 = vcmask 261120
        %v289 = vsel %vm287, %v255, 0
        %v292 = vsel %vm287, %v256, 0
        %v295 = vsel %vm287, %v257, 0
        %v298 = vsel %vm287, %v258, 0
        %v301 = vsel %vm287, %v259, 0
        %v304 = vsel %vm287, %v260, 0
        %v307 = vsel %vm287, %v261, 0
        %v310 = vsel %vm287, %v262, 0
        %v313 = vsel %vm287, %v263, 0
        %v316 = vsel %vm287, %v264, 0
        %v319 = vsel %vm287, %v265, 0
        %v322 = vsel %vm287, %v266, 0
        %v325 = vsel %vm287, %v267, 0
        %v328 = vsel %vm287, %v268, 0
        %v331 = vsel %vm287, %v269, 0
        %v334 = vsel %vm287, %v270, 0
        %v337 = vsel %vm287, %v271, 0
        %v340 = vsel %vm287, %v272, 0
        %v343 = vsel %vm287, %v273, 0
        %v346 = vsel %vm287, %v274, 0
        %v349 = vsel %vm287, %v275, 0
        %v352 = vsel %vm287, %v276, 0
        %v355 = vsel %vm287, %v277, 0
        %v358 = vsel %vm287, %v278, 0
        %v361 = vsel %vm287, %v279, 0
        %v364 = vsel %vm287, %v280, 0
        %v367 = vsel %vm287, %v281, 0
        %v370 = vsel %vm287, %v282, 0
        %v373 = vsel %vm287, %v283, 0
        %v376 = vsel %vm287, %v284, 0
        %v379 = vsel %vm287, %v285, 0
        %v382 = vsel %vm287, %v286, 0
        %384 = vmatpush.xpose.msra.mxu0 %v382
        %385 = vmatpush.xpose.msra.mxu0 %v379
        %386 = vmatpush.xpose.msra.mxu0 %v376
        %387 = vmatpush.xpose.msra.mxu0 %v373
        %388 = vmatpush.xpose.msra.mxu0 %v370
        %389 = vmatpush.xpose.msra.mxu0 %v367
        %390 = vmatpush.xpose.msra.mxu0 %v364
        %391 = vmatpush.xpose.msra.mxu0 %v361
        %392 = vmatpush.xpose.msra.mxu0 %v358
        %393 = vmatpush.xpose.msra.mxu0 %v355
        %394 = vmatpush.xpose.msra.mxu0 %v352
        %395 = vmatpush.xpose.msra.mxu0 %v349
        %396 = vmatpush.xpose.msra.mxu0 %v346
        %397 = vmatpush.xpose.msra.mxu0 %v343
        %398 = vmatpush.xpose.msra.mxu0 %v340
        %399 = vmatpush.xpose.msra.mxu0 %v337
        %400 = vmatmul.f32.gmra.mxu0 %v289
        %v401 = vpop.f32.mrf.mxu0
        %v402 = vadd.f32 0.0, %v401
        %403 = vmatmul.f32.gmra.mxu0 %v292
        %v404 = vpop.f32.mrf.mxu0
        %v405 = vadd.f32 0.0, %v404
        %406 = vmatmul.f32.gmra.mxu0 %v295
        %v407 = vpop.f32.mrf.mxu0
        %v408 = vadd.f32 0.0, %v407
        %409 = vmatmul.f32.gmra.mxu0 %v298
        %v410 = vpop.f32.mrf.mxu0
        %v411 = vadd.f32 0.0, %v410
        %412 = vmatmul.f32.gmra.mxu0 %v301
        %v413 = vpop.f32.mrf.mxu0
        %v414 = vadd.f32 0.0, %v413
        %415 = vmatmul.f32.gmra.mxu0 %v304
        %v416 = vpop.f32.mrf.mxu0
        %v417 = vadd.f32 0.0, %v416
        %418 = vmatmul.f32.gmra.mxu0 %v307
        %v419 = vpop.f32.mrf.mxu0
        %v420 = vadd.f32 0.0, %v419
        %421 = vmatmul.f32.gmra.mxu0 %v310
        %v422 = vpop.f32.mrf.mxu0
        %v423 = vadd.f32 0.0, %v422
        %424 = vmatmul.f32.gmra.mxu0 %v313
        %v425 = vpop.f32.mrf.mxu0
        %v426 = vadd.f32 0.0, %v425
        %427 = vmatmul.f32.gmra.mxu0 %v316
        %v428 = vpop.f32.mrf.mxu0
        %v429 = vadd.f32 0.0, %v428
        %430 = vmatmul.f32.gmra.mxu0 %v319
        %v431 = vpop.f32.mrf.mxu0
        %v432 = vadd.f32 0.0, %v431
        %433 = vmatmul.f32.gmra.mxu0 %v322
        %v434 = vpop.f32.mrf.mxu0
        %v435 = vadd.f32 0.0, %v434
        %436 = vmatmul.f32.gmra.mxu0 %v325
        %v437 = vpop.f32.mrf.mxu0
        %v438 = vadd.f32 0.0, %v437
        %439 = vmatmul.f32.gmra.mxu0 %v328
        %v440 = vpop.f32.mrf.mxu0
        %v441 = vadd.f32 0.0, %v440
        %442 = vmatmul.f32.gmra.mxu0 %v331
        %v443 = vpop.f32.mrf.mxu0
        %v444 = vadd.f32 0.0, %v443
        %445 = vmatmul.f32.gmra.mxu0 %v334
        %v446 = vpop.f32.mrf.mxu0
        %v447 = vadd.f32 0.0, %v446
        %448 = vdwg.mxu0
        %v449 = vlaneseq
        %v450 = vshrl.u32 %v449, 7
        %v451 = vadd.s32 %v450, 8
        %v452 = vadd.s32 %v450, 16
        %v453 = vadd.s32 %v450, 24
        %v454 = vadd.s32 %v450, 32
        %v455 = vadd.s32 %v450, 40
        %v456 = vadd.s32 %v450, 48
        %v457 = vadd.s32 %v450, 56
        %v458 = vadd.s32 %v450, 64
        %v459 = vadd.s32 %v450, 72
        %v460 = vadd.s32 %v450, 80
        %v461 = vadd.s32 %v450, 88
        %v462 = vadd.s32 %v450, 96
        %v463 = vadd.s32 %v450, 104
        %v464 = vadd.s32 %v450, 112
        %v465 = vadd.s32 %v450, 120
        %v466 = vstv %s253
        %v467 = vadd.s32 %v466, %v450
        %v468 = vadd.s32 %v466, %v451
        %v469 = vadd.s32 %v466, %v452
        %v470 = vadd.s32 %v466, %v453
        %v471 = vadd.s32 %v466, %v454
        %v472 = vadd.s32 %v466, %v455
        %v473 = vadd.s32 %v466, %v456
        %v474 = vadd.s32 %v466, %v457
        %v475 = vadd.s32 %v466, %v458
        %v476 = vadd.s32 %v466, %v459
        %v477 = vadd.s32 %v466, %v460
        %v478 = vadd.s32 %v466, %v461
        %v479 = vadd.s32 %v466, %v462
        %v480 = vadd.s32 %v466, %v463
        %v481 = vadd.s32 %v466, %v464
        %v482 = vadd.s32 %v466, %v465
        %vm483 = vcmp.lt.s32.totalorder %v467, 8
        %vm484 = vcmp.lt.s32.totalorder %v468, 8
        %vm485 = vcmp.lt.s32.totalorder %v469, 8
        %vm486 = vcmp.lt.s32.totalorder %v470, 8
        %vm487 = vcmp.lt.s32.totalorder %v471, 8
        %vm488 = vcmp.lt.s32.totalorder %v472, 8
        %vm489 = vcmp.lt.s32.totalorder %v473, 8
        %vm490 = vcmp.lt.s32.totalorder %v474, 8
        %vm491 = vcmp.lt.s32.totalorder %v475, 8
        %vm492 = vcmp.lt.s32.totalorder %v476, 8
        %vm493 = vcmp.lt.s32.totalorder %v477, 8
        %vm494 = vcmp.lt.s32.totalorder %v478, 8
        %vm495 = vcmp.lt.s32.totalorder %v479, 8
        %vm496 = vcmp.lt.s32.totalorder %v480, 8
        %vm497 = vcmp.lt.s32.totalorder %v481, 8
        %vm498 = vcmp.lt.s32.totalorder %v482, 8
        %p499 = scmp.eq.s32.totalorder %s28, 0
        // Predicated region
        $region29: #{tpu_custom_call.1} parent=27 // pred_check
          %p500 = pneg %p499
        $region30: #{tpu_custom_call.1} parent=27 // pred_check_branch
          %502 = sbr.rel (%p500) target = $region32
        $region31: #{tpu_custom_call.1} parent=27 // pred_region
          %503 = vst [vmem:[#allocation2] sm:$0x1] -inf
          %504 = vst [vmem:[#allocation3] sm:$0x1] 0.0
        $region32: #{tpu_custom_call.1} parent=27 // pred_fallthru
          _
        %p505 = scmp.eq.s32.totalorder %s28, %s27
        // Predicated region
        $region33: #{tpu_custom_call.1} parent=27 // pred_check
          %p506 = pneg %p505
        $region34: #{tpu_custom_call.1} parent=27 // pred_check_branch
          %508 = sbr.rel (%p506) target = $region36
        $region35: #{tpu_custom_call.1} parent=27 // pred_region
          %v509 = vlaneseq
          %v510 = vand.u32 %v509, 127
          %vm511 = vcmp.eq.s32.totalorder %v450, %v510
          %vm512 = vcmp.eq.s32.totalorder %v451, %v510
          %vm513 = vcmp.eq.s32.totalorder %v452, %v510
          %vm514 = vcmp.eq.s32.totalorder %v453, %v510
          %vm515 = vcmp.eq.s32.totalorder %v454, %v510
          %vm516 = vcmp.eq.s32.totalorder %v455, %v510
          %vm517 = vcmp.eq.s32.totalorder %v456, %v510
          %vm518 = vcmp.eq.s32.totalorder %v457, %v510
          %vm519 = vcmp.eq.s32.totalorder %v458, %v510
          %vm520 = vcmp.eq.s32.totalorder %v459, %v510
          %vm521 = vcmp.eq.s32.totalorder %v460, %v510
          %vm522 = vcmp.eq.s32.totalorder %v461, %v510
          %vm523 = vcmp.eq.s32.totalorder %v462, %v510
          %vm524 = vcmp.eq.s32.totalorder %v463, %v510
          %vm525 = vcmp.eq.s32.totalorder %v464, %v510
          %vm526 = vcmp.eq.s32.totalorder %v465, %v510
          %v527 = vsel %vm511, %v402, 0.0
          %v528 = vsel %vm512, %v405, 0.0
          %v529 = vsel %vm513, %v408, 0.0
          %v530 = vsel %vm514, %v411, 0.0
          %v531 = vsel %vm515, %v414, 0.0
          %v532 = vsel %vm516, %v417, 0.0
          %v533 = vsel %vm517, %v420, 0.0
          %v534 = vsel %vm518, %v423, 0.0
          %v535 = vsel %vm519, %v426, 0.0
          %v536 = vsel %vm520, %v429, 0.0
          %v537 = vsel %vm521, %v432, 0.0
          %v538 = vsel %vm522, %v435, 0.0
          %v539 = vsel %vm523, %v438, 0.0
          %v540 = vsel %vm524, %v441, 0.0
          %v541 = vsel %vm525, %v444, 0.0
          %v542 = vsel %vm526, %v447, 0.0
          %v543 = vadd.f32 %v527, %v528
          %v544 = vadd.f32 %v543, %v529
          %v545 = vadd.f32 %v544, %v530
          %v546 = vadd.f32 %v545, %v531
          %v547 = vadd.f32 %v546, %v532
          %v548 = vadd.f32 %v547, %v533
          %v549 = vadd.f32 %v548, %v534
          %v550 = vadd.f32 %v549, %v535
          %v551 = vadd.f32 %v550, %v536
          %v552 = vadd.f32 %v551, %v537
          %v553 = vadd.f32 %v552, %v538
          %v554 = vadd.f32 %v553, %v539
          %v555 = vadd.f32 %v554, %v540
          %v556 = vadd.f32 %v555, %v541
          %v557 = vadd.f32 %v556, %v542
          %v558 = vrot.slane %v557, 4
          %v559 = vadd.f32 %v557, %v558
          %v560 = vrot.slane %v559, 2
          %v561 = vadd.f32 %v559, %v560
          %v562 = vrot.slane %v561, 1
          %v563 = vadd.f32 %v561, %v562
          %564 = vst [vmem:[#allocation4] sm:$0x1] %v563
          %v565 = vsel %vm511, -142.85715, %v402
          %v566 = vsel %vm512, -142.85715, %v405
          %v567 = vsel %vm513, -142.85715, %v408
          %v568 = vsel %vm514, -142.85715, %v411
          %v569 = vsel %vm515, -142.85715, %v414
          %v570 = vsel %vm516, -142.85715, %v417
          %v571 = vsel %vm517, -142.85715, %v420
          %v572 = vsel %vm518, -142.85715, %v423
          %v573 = vsel %vm519, -142.85715, %v426
          %v574 = vsel %vm520, -142.85715, %v429
          %v575 = vsel %vm521, -142.85715, %v432
          %v576 = vsel %vm522, -142.85715, %v435
          %v577 = vsel %vm523, -142.85715, %v438
          %v578 = vsel %vm524, -142.85715, %v441
          %v579 = vsel %vm525, -142.85715, %v444
          %v580 = vsel %vm526, -142.85715, %v447
          %v581 = vsel %vm483, %v565, -1e+30
          %v582 = vsel %vm484, %v566, -1e+30
          %v583 = vsel %vm485, %v567, -1e+30
          %v584 = vsel %vm486, %v568, -1e+30
          %v585 = vsel %vm487, %v569, -1e+30
          %v586 = vsel %vm488, %v570, -1e+30
          %v587 = vsel %vm489, %v571, -1e+30
          %v588 = vsel %vm490, %v572, -1e+30
          %v589 = vsel %vm491, %v573, -1e+30
          %v590 = vsel %vm492, %v574, -1e+30
          %v591 = vsel %vm493, %v575, -1e+30
          %v592 = vsel %vm494, %v576, -1e+30
          %v593 = vsel %vm495, %v577, -1e+30
          %v594 = vsel %vm496, %v578, -1e+30
          %v595 = vsel %vm497, %v579, -1e+30
          %v596 = vsel %vm498, %v580, -1e+30
          %v597 = vld [vmem:[#allocation2] sm:$0x1]
          %v598 = vmax.f32 %v581, %v585
          %v599 = vmax.f32 %v582, %v586
          %v600 = vmax.f32 %v583, %v587
          %v601 = vmax.f32 %v584, %v588
          %v602 = vmax.f32 %v598, %v589
          %v603 = vmax.f32 %v599, %v590
          %v604 = vmax.f32 %v600, %v591
          %v605 = vmax.f32 %v601, %v592
          %v606 = vmax.f32 %v602, %v593
          %v607 = vmax.f32 %v603, %v594
          %v608 = vmax.f32 %v604, %v595
          %v609 = vmax.f32 %v605, %v596
          %v610 = vmax.f32 %v606, %v607
          %v611 = vmax.f32 %v608, %v609
          %v612 = vmax.f32 %v610, %v611
          %v613 = vrot.slane %v612, 4
          %v614 = vmax.f32 %v612, %v613
          %v615 = vrot.slane %v614, 2
          %v616 = vmax.f32 %v614, %v615
          %v617 = vrot.slane %v616, 1
          %v618 = vmax.f32 %v616, %v617
          %v619 = vmax.f32 %v597, %v618
          %v620 = vld [vmem:[#allocation3] sm:$0x1]
          %v621 = vsub.f32 %v597, %v619
          %v622 = vmul.f32 %v621, 1.442695
          %v623 = vpow.pop %v622
          %v624 = vmul.f32 %v620, %v623
          %v626 = vperm.slane %v619, 0
          %v628 = vsub.f32 %v581, %v626
          %v629 = vsub.f32 %v582, %v626
          %v630 = vsub.f32 %v583, %v626
          %v631 = vsub.f32 %v584, %v626
          %v632 = vsub.f32 %v585, %v626
          %v633 = vsub.f32 %v586, %v626
          %v634 = vsub.f32 %v587, %v626
          %v635 = vsub.f32 %v588, %v626
          %v636 = vsub.f32 %v589, %v626
          %v637 = vsub.f32 %v590, %v626
          %v638 = vsub.f32 %v591, %v626
          %v639 = vsub.f32 %v592, %v626
          %v640 = vsub.f32 %v593, %v626
          %v641 = vsub.f32 %v594, %v626
          %v642 = vsub.f32 %v595, %v626
          %v643 = vsub.f32 %v596, %v626
          %v644 = vmul.f32 %v628, 1.442695
          %v645 = vpow.pop %v644
          %v646 = vmul.f32 %v629, 1.442695
          %v647 = vpow.pop %v646
          %v648 = vmul.f32 %v630, 1.442695
          %v649 = vpow.pop %v648
          %v650 = vmul.f32 %v631, 1.442695
          %v651 = vpow.pop %v650
          %v652 = vmul.f32 %v632, 1.442695
          %v653 = vpow.pop %v652
          %v654 = vmul.f32 %v633, 1.442695
          %v655 = vpow.pop %v654
          %v656 = vmul.f32 %v634, 1.442695
          %v657 = vpow.pop %v656
          %v658 = vmul.f32 %v635, 1.442695
          %v659 = vpow.pop %v658
          %v660 = vmul.f32 %v636, 1.442695
          %v661 = vpow.pop %v660
          %v662 = vmul.f32 %v637, 1.442695
          %v663 = vpow.pop %v662
          %v664 = vmul.f32 %v638, 1.442695
          %v665 = vpow.pop %v664
          %v666 = vmul.f32 %v639, 1.442695
          %v667 = vpow.pop %v666
          %v668 = vmul.f32 %v640, 1.442695
          %v669 = vpow.pop %v668
          %v670 = vmul.f32 %v641, 1.442695
          %v671 = vpow.pop %v670
          %v672 = vmul.f32 %v642, 1.442695
          %v673 = vpow.pop %v672
          %v674 = vmul.f32 %v643, 1.442695
          %v675 = vpow.pop %v674
          %v676 = vadd.f32 %v645, %v647
          %v677 = vadd.f32 %v676, %v649
          %v678 = vadd.f32 %v677, %v651
          %v679 = vadd.f32 %v678, %v653
          %v680 = vadd.f32 %v679, %v655
          %v681 = vadd.f32 %v680, %v657
          %v682 = vadd.f32 %v681, %v659
          %v683 = vadd.f32 %v682, %v661
          %v684 = vadd.f32 %v683, %v663
          %v685 = vadd.f32 %v684, %v665
          %v686 = vadd.f32 %v685, %v667
          %v687 = vadd.f32 %v686, %v669
          %v688 = vadd.f32 %v687, %v671
          %v689 = vadd.f32 %v688, %v673
          %v690 = vadd.f32 %v689, %v675
          %v691 = vrot.slane %v690, 4
          %v692 = vadd.f32 %v690, %v691
          %v693 = vrot.slane %v692, 2
          %v694 = vadd.f32 %v692, %v693
          %v695 = vrot.slane %v694, 1
          %v696 = vadd.f32 %v694, %v695
          %v697 = vadd.f32 %v624, %v696
          %698 = vst [vmem:[#allocation3] sm:$0x1] %v697
          %699 = vst [vmem:[#allocation2] sm:$0x1] %v619
        $region36: #{tpu_custom_call.1} parent=27 // pred_fallthru
          _
        %p700 = scmp.ne.s32.totalorder %s28, %s27
        // Predicated region
        $region37: #{tpu_custom_call.1} parent=27 // pred_check
          %p701 = pneg %p700
        $region38: #{tpu_custom_call.1} parent=27 // pred_check_branch
          %703 = sbr.rel (%p701) target = $region40
        $region39: #{tpu_custom_call.1} parent=27 // pred_region
          %v704 = vsel %vm483, %v402, -1e+30
          %v705 = vsel %vm484, %v405, -1e+30
          %v706 = vsel %vm485, %v408, -1e+30
          %v707 = vsel %vm486, %v411, -1e+30
          %v708 = vsel %vm487, %v414, -1e+30
          %v709 = vsel %vm488, %v417, -1e+30
          %v710 = vsel %vm489, %v420, -1e+30
          %v711 = vsel %vm490, %v423, -1e+30
          %v712 = vsel %vm491, %v426, -1e+30
          %v713 = vsel %vm492, %v429, -1e+30
          %v714 = vsel %vm493, %v432, -1e+30
          %v715 = vsel %vm494, %v435, -1e+30
          %v716 = vsel %vm495, %v438, -1e+30
          %v717 = vsel %vm496, %v441, -1e+30
          %v718 = vsel %vm497, %v444, -1e+30
          %v719 = vsel %vm498, %v447, -1e+30
          %v720 = vld [vmem:[#allocation2] sm:$0x1]
          %v721 = vmax.f32 %v704, %v708
          %v722 = vmax.f32 %v705, %v709
          %v723 = vmax.f32 %v706, %v710
          %v724 = vmax.f32 %v707, %v711
          %v725 = vmax.f32 %v721, %v712
          %v726 = vmax.f32 %v722, %v713
          %v727 = vmax.f32 %v723, %v714
          %v728 = vmax.f32 %v724, %v715
          %v729 = vmax.f32 %v725, %v716
          %v730 = vmax.f32 %v726, %v717
          %v731 = vmax.f32 %v727, %v718
          %v732 = vmax.f32 %v728, %v719
          %v733 = vmax.f32 %v729, %v730
          %v734 = vmax.f32 %v731, %v732
          %v735 = vmax.f32 %v733, %v734
          %v736 = vrot.slane %v735, 4
          %v737 = vmax.f32 %v735, %v736
          %v738 = vrot.slane %v737, 2
          %v739 = vmax.f32 %v737, %v738
          %v740 = vrot.slane %v739, 1
          %v741 = vmax.f32 %v739, %v740
          %v742 = vmax.f32 %v720, %v741
          %v743 = vld [vmem:[#allocation3] sm:$0x1]
          %v744 = vsub.f32 %v720, %v742
          %v745 = vmul.f32 %v744, 1.442695
          %v746 = vpow.pop %v745
          %v747 = vmul.f32 %v743, %v746
          %v749 = vperm.slane %v742, 0
          %v751 = vsub.f32 %v704, %v749
          %v752 = vsub.f32 %v705, %v749
          %v753 = vsub.f32 %v706, %v749
          %v754 = vsub.f32 %v707, %v749
          %v755 = vsub.f32 %v708, %v749
          %v756 = vsub.f32 %v709, %v749
          %v757 = vsub.f32 %v710, %v749
          %v758 = vsub.f32 %v711, %v749
          %v759 = vsub.f32 %v712, %v749
          %v760 = vsub.f32 %v713, %v749
          %v761 = vsub.f32 %v714, %v749
          %v762 = vsub.f32 %v715, %v749
          %v763 = vsub.f32 %v716, %v749
          %v764 = vsub.f32 %v717, %v749
          %v765 = vsub.f32 %v718, %v749
          %v766 = vsub.f32 %v719, %v749
          %v767 = vmul.f32 %v751, 1.442695
          %v768 = vpow.pop %v767
          %v769 = vmul.f32 %v752, 1.442695
          %v770 = vpow.pop %v769
          %v771 = vmul.f32 %v753, 1.442695
          %v772 = vpow.pop %v771
          %v773 = vmul.f32 %v754, 1.442695
          %v774 = vpow.pop %v773
          %v775 = vmul.f32 %v755, 1.442695
          %v776 = vpow.pop %v775
          %v777 = vmul.f32 %v756, 1.442695
          %v778 = vpow.pop %v777
          %v779 = vmul.f32 %v757, 1.442695
          %v780 = vpow.pop %v779
          %v781 = vmul.f32 %v758, 1.442695
          %v782 = vpow.pop %v781
          %v783 = vmul.f32 %v759, 1.442695
          %v784 = vpow.pop %v783
          %v785 = vmul.f32 %v760, 1.442695
          %v786 = vpow.pop %v785
          %v787 = vmul.f32 %v761, 1.442695
          %v788 = vpow.pop %v787
          %v789 = vmul.f32 %v762, 1.442695
          %v790 = vpow.pop %v789
          %v791 = vmul.f32 %v763, 1.442695
          %v792 = vpow.pop %v791
          %v793 = vmul.f32 %v764, 1.442695
          %v794 = vpow.pop %v793
          %v795 = vmul.f32 %v765, 1.442695
          %v796 = vpow.pop %v795
          %v797 = vmul.f32 %v766, 1.442695
          %v798 = vpow.pop %v797
          %v799 = vadd.f32 %v768, %v770
          %v800 = vadd.f32 %v799, %v772
          %v801 = vadd.f32 %v800, %v774
          %v802 = vadd.f32 %v801, %v776
          %v803 = vadd.f32 %v802, %v778
          %v804 = vadd.f32 %v803, %v780
          %v805 = vadd.f32 %v804, %v782
          %v806 = vadd.f32 %v805, %v784
          %v807 = vadd.f32 %v806, %v786
          %v808 = vadd.f32 %v807, %v788
          %v809 = vadd.f32 %v808, %v790
          %v810 = vadd.f32 %v809, %v792
          %v811 = vadd.f32 %v810, %v794
          %v812 = vadd.f32 %v811, %v796
          %v813 = vadd.f32 %v812, %v798
          %v814 = vrot.slane %v813, 4
          %v815 = vadd.f32 %v813, %v814
          %v816 = vrot.slane %v815, 2
          %v817 = vadd.f32 %v815, %v816
          %v818 = vrot.slane %v817, 1
          %v819 = vadd.f32 %v817, %v818
          %v820 = vadd.f32 %v747, %v819
          %821 = vst [vmem:[#allocation3] sm:$0x1] %v820
          %822 = vst [vmem:[#allocation2] sm:$0x1] %v742
        $region40: #{tpu_custom_call.1} parent=27 // pred_fallthru
          _
        // Predicated region
        $region41: #{tpu_custom_call.1} parent=27 // pred_check
          %p823 = pneg %p499
        $region42: #{tpu_custom_call.1} parent=27 // pred_check_branch
          %825 = sbr.rel (%p823) target = $region44
        $region43: #{tpu_custom_call.1} parent=27 // pred_region
          %v826 = vld [vmem:[#allocation2] sm:$0x1]
          %v827 = vld [vmem:[#allocation3] sm:$0x1]
          %v828 = vlog2.pop %v827
          %v829 = vmul.f32 %v828, 0.6931472
          %v830 = vadd.f32 %v826, %v829
          %v831 = vld [vmem:[#allocation4] sm:$0x1]
          %v832 = vsub.f32 %v830, %v831
          %v833 = vsub.f32 %v832, %v832
          %v834 = vmul.f32 %v833, 1.442695
          %v835 = vpow.pop %v834
          %836 = vst [vmem:[%s215] sm:$0x1] %v835
          %v837 = vmax.f32 %v832, 0.0
          %v838 = vand.u32 2147483647, %v832
          %v839 = vsub.f32 0.0, %v838
          %v840 = vmul.f32 %v839, 1.442695
          %v841 = vpow.pop %v840
          %v842 = vadd.f32 %v841, 1.0
          %v843 = vlog2.pop %v842
          %v844 = vmul.f32 %v843, 0.6931472
          %v845 = vadd.f32 %v837, %v844
          %846 = vst [vmem:[%s221] sm:$0x1] %v845
        $region44: #{tpu_custom_call.1} parent=27 // pred_fallthru
          _
        %s847 = sand.u32 %s104, 1
        %s848 = scalar_lea.sflag [#allocation6], %s847
        %s849 = sand.u32 %s104, 1
        %s850 = scalar_lea.vmem [#allocation5], %s849
        %s851 = sand.u32 %s132, 1
        %s852 = scalar_lea.sflag [#allocation8], %s851
        %s853 = sand.u32 %s132, 1
        %s854 = scalar_lea.vmem [#allocation7], %s853
        // Predicated region
        $region45: #{tpu_custom_call.1} parent=27 // pred_check
          %p855 = pneg %p114
        $region46: #{tpu_custom_call.1} parent=27 // pred_check_branch
          %857 = sbr.rel (%p855) target = $region48
        $region47: #{tpu_custom_call.1} parent=27 // pred_region
          %859 = vsyncadd %s848, 0
          %s860 = sadd.s32 %s27, %s26
          %s861 = scalar_lea.hbm %s2, %s860
          %s863 = sshll.u32 %s850, 4
          %s864 = int_to_ptr.vmem [resolvable:$true] %s863
          %s865 = sshll.u32 %s861, 4
          %s866 = int_to_ptr.hbm [resolvable:$true] %s865
          %868 = dma.vmem_to_hbm [thread:$0]  %s864, 16, %s866, %s848
        $region48: #{tpu_custom_call.1} parent=27 // pred_fallthru
          _
        // Predicated region
        $region49: #{tpu_custom_call.1} parent=27 // pred_check
          %p869 = pneg %p142
        $region50: #{tpu_custom_call.1} parent=27 // pred_check_branch
          %871 = sbr.rel (%p869) target = $region52
        $region51: #{tpu_custom_call.1} parent=27 // pred_region
          %873 = vsyncadd %s852, 0
          %s874 = sadd.s32 %s27, %s26
          %s875 = scalar_lea.hbm %s3, %s874
          %s877 = sshll.u32 %s854, 4
          %s878 = int_to_ptr.vmem [resolvable:$true] %s877
          %s879 = sshll.u32 %s875, 4
          %s880 = int_to_ptr.hbm [resolvable:$true] %s879
          %882 = dma.vmem_to_hbm [thread:$0]  %s878, 16, %s880, %s852
        $region52: #{tpu_custom_call.1} parent=27 // pred_fallthru
          _
      $region28: #{tpu_custom_call.1} parent=5 // pred_fallthru
        _
      %p883 = scmp.le.s32.totalorder 2, %s16
      // Predicated region
      $region53: #{tpu_custom_call.1} parent=5 // pred_check
        %p884 = pneg %p883
      $region54: #{tpu_custom_call.1} parent=5 // pred_check_branch
        %886 = sbr.rel (%p884) target = $region56
      $region55: #{tpu_custom_call.1} parent=5 // pred_region
        %s887 = ssub.s32 %s16, 2
        // Predicated region
        $region57: #{tpu_custom_call.1} parent=55 // pred_check
          %p888 = pneg %p120
        $region58: #{tpu_custom_call.1} parent=55 // pred_check_branch
          %890 = sbr.rel (%p888) target = $region60
        $region59: #{tpu_custom_call.1} parent=55 // pred_region
          %s891 = sand.u32 %s105, 1
          %s892 = scalar_lea.sflag [#allocation6], %s891
          %s893 = sand.u32 %s105, 1
          %s894 = scalar_lea.vmem [#allocation5], %s893
          %896 = dma.done %s892, 16
        $region60: #{tpu_custom_call.1} parent=55 // pred_fallthru
          _
        // Predicated region
        $region61: #{tpu_custom_call.1} parent=55 // pred_check
          %p897 = pneg %p148
        $region62: #{tpu_custom_call.1} parent=55 // pred_check_branch
          %899 = sbr.rel (%p897) target = $region64
        $region63: #{tpu_custom_call.1} parent=55 // pred_region
          %s900 = sand.u32 %s133, 1
          %s901 = scalar_lea.sflag [#allocation8], %s900
          %s902 = sand.u32 %s133, 1
          %s903 = scalar_lea.vmem [#allocation7], %s902
          %905 = dma.done %s901, 16
        $region64: #{tpu_custom_call.1} parent=55 // pred_fallthru
          _
      $region56: #{tpu_custom_call.1} parent=5 // pred_fallthru
        _
    $region6: #{tpu_custom_call.1} parent=1 // loop_footer
      %s20 = sadd.s32 1, %s16
    $region7: #{tpu_custom_call.1} parent=1 // loop_footer_branch
      %15 = sbr.rel target = $region3
    $region8: #{tpu_custom_call.1} parent=1 // loop_exit
      _
    %906 = vsyncpa [#allocation6], 1
    %s907 = scalar_lea.sflag [#allocation6], 1
    %908 = vsyncpa %s907, 1
    %909 = vsyncpa [#allocation8], 1
    %s910 = scalar_lea.sflag [#allocation8], 1
    %911 = vsyncpa %s910, 1

</llo_original>
